<compile_context>
chip_gen: v7x
topology: tpu7x:2x2x1
jax: 0.10.0
libtpu: 0.0.40
codegen_flags: <defaults>
</compile_context>

<pallas_src>
import numpy as np
import jax
import jax.numpy as jnp
from jax.experimental import pallas as pl
from jax.experimental.pallas import tpu as pltpu

EPSILON = 10e-7       # gaussian.EPSILON (kept exactly as in the original code)
SIGMA_BOOST = 2.0     # gaussian.SIGMA_BOOST
DENOM_EPS = 1e-12     # guards an (impossible-in-practice) all-zero normalisation row
STRIP = 128           # lane-width column strip for the register-resident scatter


def _round_up(x, m):
    return ((x + m - 1) // m) * m


# ----------------------------------------------------------------------------
# Fused train-path Pallas kernel
# ----------------------------------------------------------------------------
def _fused_train_kernel(points_ref, dups_ref, means_ref, sigmas_ref, values_ref,
                        idx_ref, x_ref, out_ref, w_scratch):
    """densities + dedup + normalise + value weighting + diag mask, fused with the spmm.

    points/dups : (TC, N) f32      sampled index tuples (as floats) / duplicate mask
    means/sigmas/values : (TC, K)  hypernetwork outputs
    idx         : (TC, N) int32    sampled column (input) indices
    x           : (TI, TD) bf16    (IN-tile, D-tile) of the input features
    out         : (TC, TD) f32     resident across the IN-reduction axis
    w_scratch   : (TC, N) f32      per-C-tile nonzero values (persisted across IN steps)
    """
    i = pl.program_id(0)   # C tile  ("parallel")
    j = pl.program_id(2)   # IN tile ("arbitrary", reduction)

    tc, n = idx_ref.shape
    tile_in = x_ref.shape[0]

    # ---- once per reduction sweep: compute the N nonzero values of this C-tile ----------
    @pl.when(j == 0)
    def _():
        pts = points_ref[...]                               # (TC, N)
        dups = dups_ref[...]                                # (TC, N)
        k = means_ref.shape[1]
        w = jnp.zeros_like(pts)
        for kk in range(k):                                 # K is tiny & static
            mu = means_ref[:, kk:kk + 1]                    # (TC, 1)
            sg = sigmas_ref[:, kk:kk + 1]
            val = values_ref[:, kk:kk + 1]
            z = (pts - mu) * jax.lax.rsqrt(EPSILON + sg)    # matches torch densities()
            p = jnp.exp(-0.5 * z * z)
            p = jnp.where(dups > 0.0, 0.0, p)               # props[dups] = 0
            denom = jnp.sum(p, axis=1, keepdims=True)
            w = w + (p / (denom + DENOM_EPS)) * val         # exact division: off hot path
        # values[out == in] = 0 (no self connections) -- GLOBAL row index, hoisted out of
        # the IN loop (depends only on the C-tile).
        row = jax.lax.broadcasted_iota(jnp.int32, (tc, n), 0) + i * tc
        w = jnp.where(idx_ref[...] == row, 0.0, w)
        w_scratch[...] = w
        out_ref[...] = jnp.zeros_like(out_ref)

    # ---- hot loop: strip-mined dense scatter + bf16 MXU matmul -------------------------
    idx_local = idx_ref[...] - j * tile_in                  # (TC, N): local column index
    w = w_scratch[...]
    col = jax.lax.broadcasted_iota(jnp.int32, (tc, STRIP), 1)   # built once per step
    for s0 in range(0, tile_in, STRIP):
        idx_strip = idx_local - s0                          # shift the tiny (TC,N) indices
        w_strip = jnp.zeros((tc, STRIP), jnp.float32)       # 16 vregs @ tc=128: stays in regs
        for s in range(n):                                  # N is small & static
            w_strip = w_strip + jnp.where(idx_strip[:, s:s + 1] == col,
                                          w[:, s:s + 1], 0.0)
        x_strip = x_ref[s0:s0 + STRIP, :]                   # bf16 (STRIP, TD)
        out_ref[...] += jnp.dot(w_strip.astype(jnp.bfloat16), x_strip,
                                preferred_element_type=jnp.float32)


# ----------------------------------------------------------------------------
# Wrapper: tiling, padding, pallas_call plumbing
# ----------------------------------------------------------------------------
def _pick_tiles(C, IN, D):
    # tile_c capped at 128: keeps the scatter strip register-resident and (together with
    # the parallel D axis) keeps >=2 parallel grid steps for v7x's two TensorCores.
    tile_c = min(128, _round_up(C, 8))
    c_pad = _round_up(C, tile_c)
    # tile_in capped at 256 (multiple of 128): small x block, 2 scatter strips per step.
    tile_in = min(256, _round_up(IN, 128))
    in_pad = _round_up(IN, tile_in)
    # D is tiled too (512 cap) so VMEM stays ~1.5 MiB per step on every TPU generation;
    # no vmem_limit_bytes override needed.
    tile_d = min(512, _round_up(D, 128))
    d_pad = _round_up(D, tile_d)
    return tile_c, c_pad, tile_in, in_pad, tile_d, d_pad


def _pad_rows(a, c_pad):
    c = a.shape[0]
    if c == c_pad:
        return a
    return jnp.zeros((c_pad,) + a.shape[1:], a.dtype).at[:c].set(a)


def _pad_cast_x(x, in_pad, d_pad):
    # bf16 cast folded into the (single) padding copy: halves the pre-kernel HBM traffic
    # and the streamed x-block VMEM footprint.
    IN, D = x.shape
    xb = x.astype(jnp.bfloat16)
    if IN == in_pad and D == d_pad:
        return xb
    return jnp.zeros((in_pad, d_pad), jnp.bfloat16).at[:IN, :D].set(xb)


def fused_forward_pallas(points, dups, means, sigmas, values, idx, x):
    """Train path: props + spmm fused, tiled over (out_num, feat_dim, in_num)."""
    C, N = idx.shape
    K = means.shape[1]
    IN, D = x.shape
    tile_c, c_pad, tile_in, in_pad, tile_d, d_pad = _pick_tiles(C, IN, D)

    x_p = _pad_cast_x(x, in_pad, d_pad)
    args = [_pad_rows(a, c_pad) for a in (points, dups, means, sigmas, values, idx)]

    def cspec(last):
        return pl.BlockSpec((tile_c, last), lambda i, d, j: (i, 0))

    out = pl.pallas_call(
        _fused_train_kernel,
        out_shape=jax.ShapeDtypeStruct((c_pad, d_pad), jnp.float32),
        grid_spec=pltpu.PrefetchScalarGridSpec(
            num_scalar_prefetch=0,
            grid=(c_pad // tile_c, d_pad // tile_d, in_pad // tile_in),
            in_specs=[cspec(N), cspec(N), cspec(K), cspec(K), cspec(K), cspec(N),
                      pl.BlockSpec((tile_in, tile_d), lambda i, d, j: (j, d))],
            out_specs=pl.BlockSpec((tile_c, tile_d), lambda i, d, j: (i, d)),
            scratch_shapes=[pltpu.VMEM((tile_c, N), jnp.float32)],
        ),
        compiler_params=pltpu.CompilerParams(
            dimension_semantics=("parallel", "parallel", "arbitrary")),
    )(*args, x_p)
    return out[:C, :D]


# ----------------------------------------------------------------------------
# Eval path: k nonzeros per row -> plain-JAX gather (dense MXU sweep would be
# ~tile_in/k x redundant work; per performance review).
# ----------------------------------------------------------------------------
def eval_forward_gather(idx, values, x):
    """out[c] = sum_k values[c,k] * x[idx[c,k]]  with the diagonal (out==in) zeroed."""
    row = jnp.arange(idx.shape[0], dtype=jnp.int32)[:, None]
    w = jnp.where(idx == row, 0.0, values)
    gathered = x[idx]                                        # (c, k, D)
    return jnp.einsum('ck,ckd->cd', w, gathered)


# ----------------------------------------------------------------------------
# Pure-JAX references (same math, used for verification)
# ----------------------------------------------------------------------------
def props_ref(points, dups, means, sigmas, values):
    diff = points[:, :, None] - means[:, None, :]
    z = diff * jax.lax.rsqrt(EPSILON + sigmas)[:, None, :]
    props = jnp.exp(-0.5 * z * z)
    props = jnp.where(dups[:, :, None] > 0.0, 0.0, props)
    props = props / (jnp.sum(props, axis=1, keepdims=True) + DENOM_EPS)
    return jnp.sum(props * values[:, None, :], axis=2)


def _dense_w(idx, w, IN):
    C, N = idx.shape
    rowid = jnp.arange(C, dtype=jnp.int32)[:, None]
    w = jnp.where(idx == rowid, 0.0, w)
    onehot = (idx[:, :, None] == jnp.arange(IN, dtype=jnp.int32)[None, None, :]).astype(jnp.float32)
    return jnp.sum(w[:, :, None] * onehot, axis=1)


def spmm_ref(idx, w, x):
    """Exact f32 reference of the sparse matmul (module semantics)."""
    return _dense_w(idx, w, x.shape[0]) @ x


def spmm_bf16_ref(idx, w, x):
    """Reference that mirrors the kernel's bf16 MXU inputs / f32 accumulation."""
    W = _dense_w(idx, w, x.shape[0])
    return jnp.dot(W.astype(jnp.bfloat16), x.astype(jnp.bfloat16),
                   preferred_element_type=jnp.float32)


# ----------------------------------------------------------------------------
# MatrixHyperlayer (JAX / Pallas version)
# ----------------------------------------------------------------------------
class MatrixHyperlayerPallas:
    def __init__(self, in_num, out_num, k, radditional=0, gadditional=0,
                 region=(128,), sigma_scale=0.2, min_sigma=0.0, fix_value=False,
                 key=None):
        self.in_num = in_num
        self.out_num = out_num
        self.k = k
        self.radditional = radditional
        self.gadditional = gadditional
        self.region = region
        self.sigma_scale = sigma_scale
        self.min_sigma = min_sigma
        self.fix_value = fix_value
        # Parameter(torch.randn(k * out_num, 3)) -- deterministic init via jax.random
        self.params = jax.random.normal(key, (k * out_num, 3), dtype=jnp.float32)

    # --- hypernetwork (tiny elementwise parameter transform, plain-JAX glue) ---
    def hyper(self):
        p = self.params
        means = jax.nn.sigmoid(p[:, 0:1]) * (self.in_num - 1.0)
        sigmas = jax.nn.softplus(p[:, 1:2] + SIGMA_BOOST) + EPSILON
        sigmas = sigmas * self.in_num * self.sigma_scale + self.min_sigma
        values = p[:, 2:3]
        if self.fix_value:
            values = values * 0.0 + 1.0 / self.k
        c = self.out_num
        return (means.reshape(c, self.k), sigmas.reshape(c, self.k),
                values.reshape(c, self.k))

    # --- integer tuple sampling (RNG + integer bookkeeping, plain-JAX glue) ---
    def generate_integer_tuples(self, means, key):
        c, k = means.shape
        rng = float(self.in_num)
        rrng = float(self.region[0])
        k1, k2 = jax.random.split(key)

        # the 2 nearest integer points (floor, ceil)
        nb = jnp.stack([jnp.floor(means), jnp.ceil(means)], axis=2)          # (c, k, 2)

        # uniform samples from a small region around the rounded mean
        u = jax.random.uniform(k1, (c, k, self.radditional), jnp.float32) * (1.0 - EPSILON)
        mns = jnp.round(means)[:, :, None]
        lower = mns - rrng * 0.5
        upper = mns + rrng * 0.5
        lower = jnp.where(lower < 0.0, 0.0, lower)
        lower = jnp.where(upper > rng, rng - rrng, lower)
        rr = u * rrng + lower                                                # (c, k, radd)

        # uniform samples over the whole index range
        g = jax.random.uniform(k2, (c, k, self.gadditional), jnp.float32) * (1.0 - EPSILON) * rng

        ints = jnp.concatenate([nb, rr, g], axis=2).astype(jnp.int32)        # (c, k, 2+r+g)
        return ints.reshape(c, -1)                                           # (c, n)

    # --- duplicate marking: all but the first occurrence per row ---
    def duplicates(self, idx):
        c, n = idx.shape
        eq = idx[:, :, None] == idx[:, None, :]
        earlier = jnp.tril(jnp.ones((n, n), dtype=bool), k=-1)
        return jnp.any(eq & earlier[None, :, :], axis=2)                     # (c, n) bool

    # --- forward ---
    def forward(self, x, key, train=True, use_pallas=True):
        assert x.shape[0] == self.in_num
        means, sigmas, values = self.hyper()

        if train:
            idx = self.generate_integer_tuples(means, key)                   # (c, n) int32
            points = idx.astype(jnp.float32)
            dups = self.duplicates(idx).astype(jnp.float32)
            if use_pallas:
                return fused_forward_pallas(points, dups, means, sigmas, values, idx, x)
            w = props_ref(points, dups, means, sigmas, values)
            return spmm_ref(idx, w, x)

        # eval path: round the means, use the raw values; k nonzeros/row -> gather
        idx = jnp.round(means).astype(jnp.int32)                             # (c, k)
        if use_pallas:
            return eval_forward_gather(idx, values, x)
        return spmm_ref(idx, values, x)


# ----------------------------------------------------------------------------
if __name__ == "__main__":
    key = jax.random.PRNGKey(0)
    k_param, k_x, k_sample = jax.random.split(key, 3)

    in_num, out_num, k_components = 16, 16, 2
    feat_dim = 32

    layer = MatrixHyperlayerPallas(
        in_num=in_num, out_num=out_num, k=k_components,
        radditional=2, gadditional=2, region=(8,),
        sigma_scale=0.2, min_sigma=0.0, fix_value=False,
        key=k_param,
    )

    x = jax.random.normal(k_x, (in_num, feat_dim), dtype=jnp.float32)

    # Pallas forward (train path, the default) -- fused props + spmm kernel
    out = layer.forward(x, k_sample, train=True, use_pallas=True)
    out = jax.block_until_ready(out)
    assert out.shape == (out_num, feat_dim)
    assert not bool(jnp.any(jnp.isnan(out)))

    # Recompute the same sampled indices / weights for verification
    means, sigmas, values = layer.hyper()
    idx = layer.generate_integer_tuples(means, k_sample)
    points = idx.astype(jnp.float32)
    dups = layer.duplicates(idx).astype(jnp.float32)
    w = props_ref(points, dups, means, sigmas, values)

    # Tight check against a reference that mirrors the kernel's bf16 MXU inputs
    ref_bf16 = spmm_bf16_ref(idx, w, x)
    np.testing.assert_allclose(np.asarray(out), np.asarray(ref_bf16), rtol=5e-3, atol=5e-3)

    # Sanity check against the exact f32 module semantics (slack = bf16 MXU inputs)
    ref_f32 = layer.forward(x, k_sample, train=True, use_pallas=False)
    np.testing.assert_allclose(np.asarray(out), np.asarray(ref_f32), rtol=5e-2, atol=5e-2)

    # eval (train=False) path: plain-JAX gather vs exact dense reference
    out_eval = jax.block_until_ready(layer.forward(x, k_sample, train=False, use_pallas=True))
    ref_eval = layer.forward(x, k_sample, train=False, use_pallas=False)
    np.testing.assert_allclose(np.asarray(out_eval), np.asarray(ref_eval), rtol=1e-4, atol=1e-5)

    print("KERNEL_OK")
</pallas_src>

<mosaic_0001>
module attributes {stable_mosaic.version = 11 : i64} {
  func.func @_fused_train_kernel(%arg0: i32, %arg1: i32, %arg2: i32, %arg3: memref<16x12xf32, #tpu.memory_space<vmem>>, %arg4: memref<16x12xf32, #tpu.memory_space<vmem>>, %arg5: memref<16x2xf32, #tpu.memory_space<vmem>>, %arg6: memref<16x2xf32, #tpu.memory_space<vmem>>, %arg7: memref<16x2xf32, #tpu.memory_space<vmem>>, %arg8: memref<16x12xi32, #tpu.memory_space<vmem>>, %arg9: memref<128x128xbf16, #tpu.memory_space<vmem>>, %arg10: memref<16x128xf32, #tpu.memory_space<vmem>>, %arg11: memref<16x12xf32, #tpu.memory_space<vmem>>) attributes {dimension_semantics = [#tpu.dimension_semantics<parallel>, #tpu.dimension_semantics<parallel>, #tpu.dimension_semantics<arbitrary>], iteration_bounds = array<i64: 1, 1, 1>, scalar_prefetch = 0 : i64, scratch_operands = 1 : i64, tpu.core_type = #tpu.core_type<tc>, window_params = [{transform_indices = @transform_0, window_bounds = array<i64: 16, 12>}, {transform_indices = @transform_1, window_bounds = array<i64: 16, 12>}, {transform_indices = @transform_2, window_bounds = array<i64: 16, 2>}, {transform_indices = @transform_3, window_bounds = array<i64: 16, 2>}, {transform_indices = @transform_4, window_bounds = array<i64: 16, 2>}, {transform_indices = @transform_5, window_bounds = array<i64: 16, 12>}, {transform_indices = @transform_6, window_bounds = array<i64: 128, 128>}, {transform_indices = @transform_7, window_bounds = array<i64: 16, 128>}]} {
    %c0_i32 = arith.constant 0 : i32
    %0 = arith.cmpi eq, %arg2, %c0_i32 : i32
    %1 = arith.extui %0 : i1 to i32
    %c0_i32_0 = arith.constant 0 : i32
    %2 = arith.cmpi ne, %1, %c0_i32_0 : i32
    scf.if %2 {
      %c0_24 = arith.constant 0 : index
      %c0_25 = arith.constant 0 : index
      %126 = vector.load %arg3[%c0_24, %c0_25] : memref<16x12xf32, #tpu.memory_space<vmem>>, vector<16x12xf32>
      %c0_26 = arith.constant 0 : index
      %c0_27 = arith.constant 0 : index
      %127 = vector.load %arg4[%c0_26, %c0_27] : memref<16x12xf32, #tpu.memory_space<vmem>>, vector<16x12xf32>
      %cst_28 = arith.constant 0.000000e+00 : f32
      %128 = vector.broadcast %cst_28 : f32 to vector<16x12xf32>
      %c0_29 = arith.constant 0 : index
      %c0_30 = arith.constant 0 : index
      %129 = vector.load %arg5[%c0_29, %c0_30] : memref<16x2xf32, #tpu.memory_space<vmem>>, vector<16x1xf32>
      %c0_31 = arith.constant 0 : index
      %c0_32 = arith.constant 0 : index
      %130 = vector.load %arg6[%c0_31, %c0_32] : memref<16x2xf32, #tpu.memory_space<vmem>>, vector<16x1xf32>
      %c0_33 = arith.constant 0 : index
      %c0_34 = arith.constant 0 : index
      %131 = vector.load %arg7[%c0_33, %c0_34] : memref<16x2xf32, #tpu.memory_space<vmem>>, vector<16x1xf32>
      %132 = vector.broadcast %129 : vector<16x1xf32> to vector<16x12xf32>
      %133 = arith.subf %126, %132 : vector<16x12xf32>
      %cst_35 = arith.constant 9.99999997E-7 : f32
      %134 = vector.broadcast %cst_35 : f32 to vector<16x1xf32>
      %135 = arith.addf %134, %130 : vector<16x1xf32>
      %136 = math.rsqrt %135 : vector<16x1xf32>
      %137 = vector.broadcast %136 : vector<16x1xf32> to vector<16x12xf32>
      %138 = arith.mulf %133, %137 : vector<16x12xf32>
      %cst_36 = arith.constant -5.000000e-01 : f32
      %139 = vector.broadcast %cst_36 : f32 to vector<16x12xf32>
      %140 = arith.mulf %139, %138 : vector<16x12xf32>
      %141 = arith.mulf %140, %138 : vector<16x12xf32>
      %142 = math.exp %141 : vector<16x12xf32>
      %cst_37 = arith.constant 0.000000e+00 : f32
      %143 = vector.broadcast %cst_37 : f32 to vector<16x12xf32>
      %144 = arith.cmpf ogt, %127, %143 : vector<16x12xf32>
      %cst_38 = arith.constant 0.000000e+00 : f32
      %145 = vector.broadcast %cst_38 : f32 to vector<16x12xf32>
      %146 = arith.select %144, %145, %142 : vector<16x12xi1>, vector<16x12xf32>
      %cst_39 = arith.constant dense<0.000000e+00> : vector<16xf32>
      %147 = vector.multi_reduction <add>, %146, %cst_39 [1] : vector<16x12xf32> to vector<16xf32>
      %148 = vector.shape_cast %147 : vector<16xf32> to vector<16x1xf32>
      %cst_40 = arith.constant 9.99999996E-13 : f32
      %149 = vector.broadcast %cst_40 : f32 to vector<16x1xf32>
      %150 = arith.addf %148, %149 : vector<16x1xf32>
      %151 = vector.broadcast %150 : vector<16x1xf32> to vector<16x12xf32>
      %152 = arith.divf %146, %151 : vector<16x12xf32>
      %153 = vector.broadcast %131 : vector<16x1xf32> to vector<16x12xf32>
      %154 = arith.mulf %152, %153 : vector<16x12xf32>
      %155 = arith.addf %128, %154 : vector<16x12xf32>
      %c0_41 = arith.constant 0 : index
      %c1 = arith.constant 1 : index
      %156 = vector.load %arg5[%c0_41, %c1] : memref<16x2xf32, #tpu.memory_space<vmem>>, vector<16x1xf32>
      %c0_42 = arith.constant 0 : index
      %c1_43 = arith.constant 1 : index
      %157 = vector.load %arg6[%c0_42, %c1_43] : memref<16x2xf32, #tpu.memory_space<vmem>>, vector<16x1xf32>
      %c0_44 = arith.constant 0 : index
      %c1_45 = arith.constant 1 : index
      %158 = vector.load %arg7[%c0_44, %c1_45] : memref<16x2xf32, #tpu.memory_space<vmem>>, vector<16x1xf32>
      %159 = vector.broadcast %156 : vector<16x1xf32> to vector<16x12xf32>
      %160 = arith.subf %126, %159 : vector<16x12xf32>
      %cst_46 = arith.constant 9.99999997E-7 : f32
      %161 = vector.broadcast %cst_46 : f32 to vector<16x1xf32>
      %162 = arith.addf %161, %157 : vector<16x1xf32>
      %163 = math.rsqrt %162 : vector<16x1xf32>
      %164 = vector.broadcast %163 : vector<16x1xf32> to vector<16x12xf32>
      %165 = arith.mulf %160, %164 : vector<16x12xf32>
      %cst_47 = arith.constant -5.000000e-01 : f32
      %166 = vector.broadcast %cst_47 : f32 to vector<16x12xf32>
      %167 = arith.mulf %166, %165 : vector<16x12xf32>
      %168 = arith.mulf %167, %165 : vector<16x12xf32>
      %169 = math.exp %168 : vector<16x12xf32>
      %cst_48 = arith.constant 0.000000e+00 : f32
      %170 = vector.broadcast %cst_48 : f32 to vector<16x12xf32>
      %171 = arith.cmpf ogt, %127, %170 : vector<16x12xf32>
      %cst_49 = arith.constant 0.000000e+00 : f32
      %172 = vector.broadcast %cst_49 : f32 to vector<16x12xf32>
      %173 = arith.select %171, %172, %169 : vector<16x12xi1>, vector<16x12xf32>
      %cst_50 = arith.constant dense<0.000000e+00> : vector<16xf32>
      %174 = vector.multi_reduction <add>, %173, %cst_50 [1] : vector<16x12xf32> to vector<16xf32>
      %175 = vector.shape_cast %174 : vector<16xf32> to vector<16x1xf32>
      %cst_51 = arith.constant 9.99999996E-13 : f32
      %176 = vector.broadcast %cst_51 : f32 to vector<16x1xf32>
      %177 = arith.addf %175, %176 : vector<16x1xf32>
      %178 = vector.broadcast %177 : vector<16x1xf32> to vector<16x12xf32>
      %179 = arith.divf %173, %178 : vector<16x12xf32>
      %180 = vector.broadcast %158 : vector<16x1xf32> to vector<16x12xf32>
      %181 = arith.mulf %179, %180 : vector<16x12xf32>
      %182 = arith.addf %155, %181 : vector<16x12xf32>
      %183 = tpu.iota {dimensions = array<i32: 0>} : vector<16x12xi32>
      %c16_i32 = arith.constant 16 : i32
      %184 = arith.muli %arg0, %c16_i32 : i32
      %185 = vector.broadcast %184 : i32 to vector<16x12xi32>
      %186 = arith.addi %183, %185 : vector<16x12xi32>
      %c0_52 = arith.constant 0 : index
      %c0_53 = arith.constant 0 : index
      %187 = vector.load %arg8[%c0_52, %c0_53] : memref<16x12xi32, #tpu.memory_space<vmem>>, vector<16x12xi32>
      %188 = arith.cmpi eq, %187, %186 : vector<16x12xi32>
      %cst_54 = arith.constant 0.000000e+00 : f32
      %189 = vector.broadcast %cst_54 : f32 to vector<16x12xf32>
      %190 = arith.select %188, %189, %182 : vector<16x12xi1>, vector<16x12xf32>
      %c0_55 = arith.constant 0 : index
      %c0_56 = arith.constant 0 : index
      %191 = vector.load %arg11[%c0_55, %c0_56] : memref<16x12xf32, #tpu.memory_space<vmem>>, vector<16x12xf32>
      tpu.vector_store %arg11[%c0_55, %c0_56], %190 {strides = array<i32>} : memref<16x12xf32, #tpu.memory_space<vmem>>, vector<16x12xf32>,
      %cst_57 = arith.constant 0.000000e+00 : f32
      %192 = vector.broadcast %cst_57 : f32 to vector<16x128xf32>
      %c0_58 = arith.constant 0 : index
      %c0_59 = arith.constant 0 : index
      %193 = vector.load %arg10[%c0_58, %c0_59] : memref<16x128xf32, #tpu.memory_space<vmem>>, vector<16x128xf32>
      tpu.vector_store %arg10[%c0_58, %c0_59], %192 {strides = array<i32>} : memref<16x128xf32, #tpu.memory_space<vmem>>, vector<16x128xf32>,
    } else {
    }
    %c0 = arith.constant 0 : index
    %c0_1 = arith.constant 0 : index
    %3 = vector.load %arg8[%c0, %c0_1] : memref<16x12xi32, #tpu.memory_space<vmem>>, vector<16x12xi32>
    %c128_i32 = arith.constant 128 : i32
    %4 = arith.muli %arg2, %c128_i32 : i32
    %5 = vector.broadcast %4 : i32 to vector<16x12xi32>
    %6 = arith.subi %3, %5 : vector<16x12xi32>
    %c0_2 = arith.constant 0 : index
    %c0_3 = arith.constant 0 : index
    %7 = vector.load %arg11[%c0_2, %c0_3] : memref<16x12xf32, #tpu.memory_space<vmem>>, vector<16x12xf32>
    %8 = tpu.iota {dimensions = array<i32: 1>} : vector<16x128xi32>
    %c0_i32_4 = arith.constant 0 : i32
    %9 = vector.broadcast %c0_i32_4 : i32 to vector<16x12xi32>
    %10 = arith.subi %6, %9 : vector<16x12xi32>
    %cst = arith.constant 0.000000e+00 : f32
    %11 = vector.broadcast %cst : f32 to vector<16x128xf32>
    %12 = vector.extract_strided_slice %10 {offsets = [0, 0], sizes = [16, 1], strides = [1, 1]} : vector<16x12xi32> to vector<16x1xi32>
    %13 = vector.broadcast %12 : vector<16x1xi32> to vector<16x128xi32>
    %14 = arith.cmpi eq, %13, %8 : vector<16x128xi32>
    %15 = vector.extract_strided_slice %7 {offsets = [0, 0], sizes = [16, 1], strides = [1, 1]} : vector<16x12xf32> to vector<16x1xf32>
    %cst_5 = arith.constant 0.000000e+00 : f32
    %16 = vector.shape_cast %15 : vector<16x1xf32> to vector<16x1xf32>
    %17 = vector.broadcast %16 : vector<16x1xf32> to vector<16x128xf32>
    %18 = vector.broadcast %cst_5 : f32 to vector<16x128xf32>
    %19 = arith.select %14, %17, %18 : vector<16x128xi1>, vector<16x128xf32>
    %20 = arith.addf %11, %19 : vector<16x128xf32>
    %21 = vector.extract_strided_slice %10 {offsets = [0, 1], sizes = [16, 1], strides = [1, 1]} : vector<16x12xi32> to vector<16x1xi32>
    %22 = vector.broadcast %21 : vector<16x1xi32> to vector<16x128xi32>
    %23 = arith.cmpi eq, %22, %8 : vector<16x128xi32>
    %24 = vector.extract_strided_slice %7 {offsets = [0, 1], sizes = [16, 1], strides = [1, 1]} : vector<16x12xf32> to vector<16x1xf32>
    %cst_6 = arith.constant 0.000000e+00 : f32
    %25 = vector.shape_cast %24 : vector<16x1xf32> to vector<16x1xf32>
    %26 = vector.broadcast %25 : vector<16x1xf32> to vector<16x128xf32>
    %27 = vector.broadcast %cst_6 : f32 to vector<16x128xf32>
    %28 = arith.select %23, %26, %27 : vector<16x128xi1>, vector<16x128xf32>
    %29 = arith.addf %20, %28 : vector<16x128xf32>
    %30 = vector.extract_strided_slice %10 {offsets = [0, 2], sizes = [16, 1], strides = [1, 1]} : vector<16x12xi32> to vector<16x1xi32>
    %31 = vector.broadcast %30 : vector<16x1xi32> to vector<16x128xi32>
    %32 = arith.cmpi eq, %31, %8 : vector<16x128xi32>
    %33 = vector.extract_strided_slice %7 {offsets = [0, 2], sizes = [16, 1], strides = [1, 1]} : vector<16x12xf32> to vector<16x1xf32>
    %cst_7 = arith.constant 0.000000e+00 : f32
    %34 = vector.shape_cast %33 : vector<16x1xf32> to vector<16x1xf32>
    %35 = vector.broadcast %34 : vector<16x1xf32> to vector<16x128xf32>
    %36 = vector.broadcast %cst_7 : f32 to vector<16x128xf32>
    %37 = arith.select %32, %35, %36 : vector<16x128xi1>, vector<16x128xf32>
    %38 = arith.addf %29, %37 : vector<16x128xf32>
    %39 = vector.extract_strided_slice %10 {offsets = [0, 3], sizes = [16, 1], strides = [1, 1]} : vector<16x12xi32> to vector<16x1xi32>
    %40 = vector.broadcast %39 : vector<16x1xi32> to vector<16x128xi32>
    %41 = arith.cmpi eq, %40, %8 : vector<16x128xi32>
    %42 = vector.extract_strided_slice %7 {offsets = [0, 3], sizes = [16, 1], strides = [1, 1]} : vector<16x12xf32> to vector<16x1xf32>
    %cst_8 = arith.constant 0.000000e+00 : f32
    %43 = vector.shape_cast %42 : vector<16x1xf32> to vector<16x1xf32>
    %44 = vector.broadcast %43 : vector<16x1xf32> to vector<16x128xf32>
    %45 = vector.broadcast %cst_8 : f32 to vector<16x128xf32>
    %46 = arith.select %41, %44, %45 : vector<16x128xi1>, vector<16x128xf32>
    %47 = arith.addf %38, %46 : vector<16x128xf32>
    %48 = vector.extract_strided_slice %10 {offsets = [0, 4], sizes = [16, 1], strides = [1, 1]} : vector<16x12xi32> to vector<16x1xi32>
    %49 = vector.broadcast %48 : vector<16x1xi32> to vector<16x128xi32>
    %50 = arith.cmpi eq, %49, %8 : vector<16x128xi32>
    %51 = vector.extract_strided_slice %7 {offsets = [0, 4], sizes = [16, 1], strides = [1, 1]} : vector<16x12xf32> to vector<16x1xf32>
    %cst_9 = arith.constant 0.000000e+00 : f32
    %52 = vector.shape_cast %51 : vector<16x1xf32> to vector<16x1xf32>
    %53 = vector.broadcast %52 : vector<16x1xf32> to vector<16x128xf32>
    %54 = vector.broadcast %cst_9 : f32 to vector<16x128xf32>
    %55 = arith.select %50, %53, %54 : vector<16x128xi1>, vector<16x128xf32>
    %56 = arith.addf %47, %55 : vector<16x128xf32>
    %57 = vector.extract_strided_slice %10 {offsets = [0, 5], sizes = [16, 1], strides = [1, 1]} : vector<16x12xi32> to vector<16x1xi32>
    %58 = vector.broadcast %57 : vector<16x1xi32> to vector<16x128xi32>
    %59 = arith.cmpi eq, %58, %8 : vector<16x128xi32>
    %60 = vector.extract_strided_slice %7 {offsets = [0, 5], sizes = [16, 1], strides = [1, 1]} : vector<16x12xf32> to vector<16x1xf32>
    %cst_10 = arith.constant 0.000000e+00 : f32
    %61 = vector.shape_cast %60 : vector<16x1xf32> to vector<16x1xf32>
    %62 = vector.broadcast %61 : vector<16x1xf32> to vector<16x128xf32>
    %63 = vector.broadcast %cst_10 : f32 to vector<16x128xf32>
    %64 = arith.select %59, %62, %63 : vector<16x128xi1>, vector<16x128xf32>
    %65 = arith.addf %56, %64 : vector<16x128xf32>
    %66 = vector.extract_strided_slice %10 {offsets = [0, 6], sizes = [16, 1], strides = [1, 1]} : vector<16x12xi32> to vector<16x1xi32>
    %67 = vector.broadcast %66 : vector<16x1xi32> to vector<16x128xi32>
    %68 = arith.cmpi eq, %67, %8 : vector<16x128xi32>
    %69 = vector.extract_strided_slice %7 {offsets = [0, 6], sizes = [16, 1], strides = [1, 1]} : vector<16x12xf32> to vector<16x1xf32>
    %cst_11 = arith.constant 0.000000e+00 : f32
    %70 = vector.shape_cast %69 : vector<16x1xf32> to vector<16x1xf32>
    %71 = vector.broadcast %70 : vector<16x1xf32> to vector<16x128xf32>
    %72 = vector.broadcast %cst_11 : f32 to vector<16x128xf32>
    %73 = arith.select %68, %71, %72 : vector<16x128xi1>, vector<16x128xf32>
    %74 = arith.addf %65, %73 : vector<16x128xf32>
    %75 = vector.extract_strided_slice %10 {offsets = [0, 7], sizes = [16, 1], strides = [1, 1]} : vector<16x12xi32> to vector<16x1xi32>
    %76 = vector.broadcast %75 : vector<16x1xi32> to vector<16x128xi32>
    %77 = arith.cmpi eq, %76, %8 : vector<16x128xi32>
    %78 = vector.extract_strided_slice %7 {offsets = [0, 7], sizes = [16, 1], strides = [1, 1]} : vector<16x12xf32> to vector<16x1xf32>
    %cst_12 = arith.constant 0.000000e+00 : f32
    %79 = vector.shape_cast %78 : vector<16x1xf32> to vector<16x1xf32>
    %80 = vector.broadcast %79 : vector<16x1xf32> to vector<16x128xf32>
    %81 = vector.broadcast %cst_12 : f32 to vector<16x128xf32>
    %82 = arith.select %77, %80, %81 : vector<16x128xi1>, vector<16x128xf32>
    %83 = arith.addf %74, %82 : vector<16x128xf32>
    %84 = vector.extract_strided_slice %10 {offsets = [0, 8], sizes = [16, 1], strides = [1, 1]} : vector<16x12xi32> to vector<16x1xi32>
    %85 = vector.broadcast %84 : vector<16x1xi32> to vector<16x128xi32>
    %86 = arith.cmpi eq, %85, %8 : vector<16x128xi32>
    %87 = vector.extract_strided_slice %7 {offsets = [0, 8], sizes = [16, 1], strides = [1, 1]} : vector<16x12xf32> to vector<16x1xf32>
    %cst_13 = arith.constant 0.000000e+00 : f32
    %88 = vector.shape_cast %87 : vector<16x1xf32> to vector<16x1xf32>
    %89 = vector.broadcast %88 : vector<16x1xf32> to vector<16x128xf32>
    %90 = vector.broadcast %cst_13 : f32 to vector<16x128xf32>
    %91 = arith.select %86, %89, %90 : vector<16x128xi1>, vector<16x128xf32>
    %92 = arith.addf %83, %91 : vector<16x128xf32>
    %93 = vector.extract_strided_slice %10 {offsets = [0, 9], sizes = [16, 1], strides = [1, 1]} : vector<16x12xi32> to vector<16x1xi32>
    %94 = vector.broadcast %93 : vector<16x1xi32> to vector<16x128xi32>
    %95 = arith.cmpi eq, %94, %8 : vector<16x128xi32>
    %96 = vector.extract_strided_slice %7 {offsets = [0, 9], sizes = [16, 1], strides = [1, 1]} : vector<16x12xf32> to vector<16x1xf32>
    %cst_14 = arith.constant 0.000000e+00 : f32
    %97 = vector.shape_cast %96 : vector<16x1xf32> to vector<16x1xf32>
    %98 = vector.broadcast %97 : vector<16x1xf32> to vector<16x128xf32>
    %99 = vector.broadcast %cst_14 : f32 to vector<16x128xf32>
    %100 = arith.select %95, %98, %99 : vector<16x128xi1>, vector<16x128xf32>
    %101 = arith.addf %92, %100 : vector<16x128xf32>
    %102 = vector.extract_strided_slice %10 {offsets = [0, 10], sizes = [16, 1], strides = [1, 1]} : vector<16x12xi32> to vector<16x1xi32>
    %103 = vector.broadcast %102 : vector<16x1xi32> to vector<16x128xi32>
    %104 = arith.cmpi eq, %103, %8 : vector<16x128xi32>
    %105 = vector.extract_strided_slice %7 {offsets = [0, 10], sizes = [16, 1], strides = [1, 1]} : vector<16x12xf32> to vector<16x1xf32>
    %cst_15 = arith.constant 0.000000e+00 : f32
    %106 = vector.shape_cast %105 : vector<16x1xf32> to vector<16x1xf32>
    %107 = vector.broadcast %106 : vector<16x1xf32> to vector<16x128xf32>
    %108 = vector.broadcast %cst_15 : f32 to vector<16x128xf32>
    %109 = arith.select %104, %107, %108 : vector<16x128xi1>, vector<16x128xf32>
    %110 = arith.addf %101, %109 : vector<16x128xf32>
    %111 = vector.extract_strided_slice %10 {offsets = [0, 11], sizes = [16, 1], strides = [1, 1]} : vector<16x12xi32> to vector<16x1xi32>
    %112 = vector.broadcast %111 : vector<16x1xi32> to vector<16x128xi32>
    %113 = arith.cmpi eq, %112, %8 : vector<16x128xi32>
    %114 = vector.extract_strided_slice %7 {offsets = [0, 11], sizes = [16, 1], strides = [1, 1]} : vector<16x12xf32> to vector<16x1xf32>
    %cst_16 = arith.constant 0.000000e+00 : f32
    %115 = vector.shape_cast %114 : vector<16x1xf32> to vector<16x1xf32>
    %116 = vector.broadcast %115 : vector<16x1xf32> to vector<16x128xf32>
    %117 = vector.broadcast %cst_16 : f32 to vector<16x128xf32>
    %118 = arith.select %113, %116, %117 : vector<16x128xi1>, vector<16x128xf32>
    %119 = arith.addf %110, %118 : vector<16x128xf32>
    %c0_17 = arith.constant 0 : index
    %c0_18 = arith.constant 0 : index
    %120 = vector.load %arg9[%c0_17, %c0_18] : memref<128x128xbf16, #tpu.memory_space<vmem>>, vector<128x128xbf16>
    %c0_19 = arith.constant 0 : index
    %c0_20 = arith.constant 0 : index
    %121 = vector.load %arg10[%c0_19, %c0_20] : memref<16x128xf32, #tpu.memory_space<vmem>>, vector<16x128xf32>
    %122 = arith.truncf %119 : vector<16x128xf32> to vector<16x128xbf16>
    %cst_21 = arith.constant dense<0.000000e+00> : vector<16x128xf32>
    %123 = tpu.matmul %122, %120, %cst_21 {dimension_numbers = #tpu.dot_dimension_numbers<[1], [0], [0], [1], [0, 0, 1, 1], [], []>} : vector<16x128xbf16>, vector<128x128xbf16>, vector<16x128xf32> -> vector<16x128xf32>
    %124 = arith.addf %121, %123 : vector<16x128xf32>
    %c0_22 = arith.constant 0 : index
    %c0_23 = arith.constant 0 : index
    %125 = vector.load %arg10[%c0_22, %c0_23] : memref<16x128xf32, #tpu.memory_space<vmem>>, vector<16x128xf32>
    tpu.vector_store %arg10[%c0_22, %c0_23], %124 {strides = array<i32>} : memref<16x128xf32, #tpu.memory_space<vmem>>, vector<16x128xf32>,
    return
  }
  func.func @transform_0(%arg0: i32, %arg1: i32, %arg2: i32) -> (i32, i32) {
    %c0_i32 = arith.constant 0 : i32
    %c0_i32_0 = arith.constant 0 : i32
    return %arg0, %c0_i32 : i32, i32
  }
  func.func @transform_1(%arg0: i32, %arg1: i32, %arg2: i32) -> (i32, i32) {
    %c0_i32 = arith.constant 0 : i32
    %c0_i32_0 = arith.constant 0 : i32
    return %arg0, %c0_i32 : i32, i32
  }
  func.func @transform_2(%arg0: i32, %arg1: i32, %arg2: i32) -> (i32, i32) {
    %c0_i32 = arith.constant 0 : i32
    %c0_i32_0 = arith.constant 0 : i32
    return %arg0, %c0_i32 : i32, i32
  }
  func.func @transform_3(%arg0: i32, %arg1: i32, %arg2: i32) -> (i32, i32) {
    %c0_i32 = arith.constant 0 : i32
    %c0_i32_0 = arith.constant 0 : i32
    return %arg0, %c0_i32 : i32, i32
  }
  func.func @transform_4(%arg0: i32, %arg1: i32, %arg2: i32) -> (i32, i32) {
    %c0_i32 = arith.constant 0 : i32
    %c0_i32_0 = arith.constant 0 : i32
    return %arg0, %c0_i32 : i32, i32
  }
  func.func @transform_5(%arg0: i32, %arg1: i32, %arg2: i32) -> (i32, i32) {
    %c0_i32 = arith.constant 0 : i32
    %c0_i32_0 = arith.constant 0 : i32
    return %arg0, %c0_i32 : i32, i32
  }
  func.func @transform_6(%arg0: i32, %arg1: i32, %arg2: i32) -> (i32, i32) {
    %c0_i32 = arith.constant 0 : i32
    return %arg2, %arg1 : i32, i32
  }
  func.func @transform_7(%arg0: i32, %arg1: i32, %arg2: i32) -> (i32, i32) {
    %c0_i32 = arith.constant 0 : i32
    return %arg0, %arg1 : i32, i32
  }
}

</mosaic_0001>

<llo_original>
// kernel: tpu_custom_call.1
$region0: #{tpu_custom_call.1}
  #allocation0 [shape = 'u32[]', space=smem, size = 0x4, offset = 0x4, fixed_abs, tag = 'smem constant byte address 0x4 - core index']
  #allocation1 [shape = 'u32[144,128]{1,0:T(1,128)}', space=vmem, size = 0x12000, scoped, tag = 'internal scratch']
  #allocation2 [shape = 'f32[16,12]{1,0:T(8,128)}', space=vmem, size = 0x2000, scoped, tag = 'scratch operand']
  %s0 = inlined_call_operand.hbm [shape: f32[16,12], index: 0, kind: input, shape index: {}]
  %s1 = inlined_call_operand.hbm [shape: f32[16,12], index: 1, kind: input, shape index: {}]
  %s2 = inlined_call_operand.vmem [shape: f32[16,2], index: 2, kind: input, shape index: {}]
  %s3 = inlined_call_operand.vmem [shape: f32[16,2], index: 3, kind: input, shape index: {}]
  %s4 = inlined_call_operand.vmem [shape: f32[16,2], index: 4, kind: input, shape index: {}]
  %s5 = inlined_call_operand.hbm [shape: s32[16,12], index: 5, kind: input, shape index: {}]
  %s6 = inlined_call_operand.vmem [shape: bf16[128,128], index: 6, kind: input, shape index: {}]
  %s7 = inlined_call_operand.hbm [shape: f32[16,128], index: 7, kind: output, shape index: {}]
  %s8 = sld [smem:[#allocation0]]
  $region54: #{tpu_custom_call.1} parent=0
    _
  %s10 = ssub.s32 1, %s8
  %s11 = scalar_select 0, %s10, %s8
  $region1: #{tpu_custom_call.1} parent=0
    #allocation3 [shape = 'u8[8192]{0}', space=vmem, size = 0x2000, scoped, tag = 'input window, operand 0, single buffered']
    #allocation4 [shape = 's32[1]{0}', space=sflag, size = 0x4, scoped, tag = 'scoped memory for tpu_custom_call.1']
    #allocation5 [shape = 's32[1]{0}', space=sflag, size = 0x4, scoped, tag = 'scoped memory for tpu_custom_call.1']
    #allocation6 [shape = 'u8[8192]{0}', space=vmem, size = 0x2000, scoped, tag = 'input window, operand 1, single buffered']
    #allocation7 [shape = 's32[1]{0}', space=sflag, size = 0x4, scoped, tag = 'scoped memory for tpu_custom_call.1']
    #allocation8 [shape = 'u8[8192]{0}', space=vmem, size = 0x2000, scoped, tag = 'input window, operand 5, single buffered']
    #allocation9 [shape = 'u8[8192]{0}', space=vmem, size = 0x2000, scoped, tag = 'output window, operand 0, single buffered']
    %12 = vsyncpa [#allocation4], 0
    %13 = vsyncpa [#allocation7], 0
    %14 = vsyncpa [#allocation5], 0
    // Predicated region
    $region2: #{tpu_custom_call.1} parent=1 // pred_check
      _
    $region3: #{tpu_custom_call.1} parent=1 // pred_check_branch
      %16 = sbr.rel (0) target = $region5
    $region4: #{tpu_custom_call.1} parent=1 // pred_region
      %s18 = ssub.s32 256, 256
      %19 = vsyncadd [#allocation4], %s18
      %s20 = sshll.u32 [#allocation3], 4
      %s21 = int_to_ptr.vmem [resolvable:$true] %s20
      %26 = dma.hbm_to_vmem [thread:$0]  %s0, 256, %s21, [#allocation4], 128, 128, 8
    $region5: #{tpu_custom_call.1} parent=1 // pred_fallthru
      _
    // Predicated region
    $region6: #{tpu_custom_call.1} parent=1 // pred_check
      _
    $region7: #{tpu_custom_call.1} parent=1 // pred_check_branch
      %28 = sbr.rel (0) target = $region9
    $region8: #{tpu_custom_call.1} parent=1 // pred_region
      %s30 = ssub.s32 256, 256
      %31 = vsyncadd [#allocation7], %s30
      %s32 = sshll.u32 [#allocation6], 4
      %s33 = int_to_ptr.vmem [resolvable:$true] %s32
      %38 = dma.hbm_to_vmem [thread:$0]  %s1, 256, %s33, [#allocation7], 128, 128, 8
    $region9: #{tpu_custom_call.1} parent=1 // pred_fallthru
      _
    // Predicated region
    $region10: #{tpu_custom_call.1} parent=1 // pred_check
      _
    $region11: #{tpu_custom_call.1} parent=1 // pred_check_branch
      %40 = sbr.rel (0) target = $region13
    $region12: #{tpu_custom_call.1} parent=1 // pred_region
      _
    $region13: #{tpu_custom_call.1} parent=1 // pred_fallthru
      _
    // Predicated region
    $region14: #{tpu_custom_call.1} parent=1 // pred_check
      _
    $region15: #{tpu_custom_call.1} parent=1 // pred_check_branch
      %42 = sbr.rel (0) target = $region17
    $region16: #{tpu_custom_call.1} parent=1 // pred_region
      _
    $region17: #{tpu_custom_call.1} parent=1 // pred_fallthru
      _
    // Predicated region
    $region18: #{tpu_custom_call.1} parent=1 // pred_check
      _
    $region19: #{tpu_custom_call.1} parent=1 // pred_check_branch
      %44 = sbr.rel (0) target = $region21
    $region20: #{tpu_custom_call.1} parent=1 // pred_region
      _
    $region21: #{tpu_custom_call.1} parent=1 // pred_fallthru
      _
    // Predicated region
    $region22: #{tpu_custom_call.1} parent=1 // pred_check
      _
    $region23: #{tpu_custom_call.1} parent=1 // pred_check_branch
      %46 = sbr.rel (0) target = $region25
    $region24: #{tpu_custom_call.1} parent=1 // pred_region
      %s48 = ssub.s32 256, 256
      %49 = vsyncadd [#allocation7], %s48
      %s50 = sshll.u32 [#allocation8], 4
      %s51 = int_to_ptr.vmem [resolvable:$true] %s50
      %56 = dma.hbm_to_vmem [thread:$0]  %s5, 256, %s51, [#allocation7], 128, 128, 8
    $region25: #{tpu_custom_call.1} parent=1 // pred_fallthru
      _
    // Predicated region
    $region26: #{tpu_custom_call.1} parent=1 // pred_check
      _
    $region27: #{tpu_custom_call.1} parent=1 // pred_check_branch
      %58 = sbr.rel (0) target = $region29
    $region28: #{tpu_custom_call.1} parent=1 // pred_region
      _
    $region29: #{tpu_custom_call.1} parent=1 // pred_fallthru
      _
    // Predicated region
    $region30: #{tpu_custom_call.1} parent=1 // pred_check
      _
    $region31: #{tpu_custom_call.1} parent=1 // pred_check_branch
      %60 = sbr.rel (0) target = $region33
    $region32: #{tpu_custom_call.1} parent=1 // pred_region
      %61 = dma.done [#allocation4], 256
    $region33: #{tpu_custom_call.1} parent=1 // pred_fallthru
      _
    // Predicated region
    $region34: #{tpu_custom_call.1} parent=1 // pred_check
      _
    $region35: #{tpu_custom_call.1} parent=1 // pred_check_branch
      %63 = sbr.rel (0) target = $region37
    $region36: #{tpu_custom_call.1} parent=1 // pred_region
      %64 = dma.done [#allocation7], 256
    $region37: #{tpu_custom_call.1} parent=1 // pred_fallthru
      _
    // Predicated region
    $region38: #{tpu_custom_call.1} parent=1 // pred_check
      _
    $region39: #{tpu_custom_call.1} parent=1 // pred_check_branch
      %66 = sbr.rel (0) target = $region41
    $region40: #{tpu_custom_call.1} parent=1 // pred_region
      %67 = dma.done [#allocation7], 256
    $region41: #{tpu_custom_call.1} parent=1 // pred_fallthru
      _
    %p69 = scmp.eq.s32.totalorder 0, 0
    // Predicated region
    $region42: #{tpu_custom_call.1} parent=1 // pred_check
      %p70 = pneg %p69
    $region43: #{tpu_custom_call.1} parent=1 // pred_check_branch
      %72 = sbr.rel (%p70) target = $region45
    $region44: #{tpu_custom_call.1} parent=1 // pred_region
      %v73 = vld [vmem:[#allocation3] sm:$0xff]
      %v74 = vld [vmem:[#allocation3 + $0x8] sm:$0xff]
      %v75 = vld [vmem:[#allocation6] sm:$0xff]
      %v76 = vld [vmem:[#allocation6 + $0x8] sm:$0xff]
      %v77 = vld [vmem:[%s2] sm:$0xff]
      %v78 = vld [vmem:[%s2 + $0x8] sm:$0xff]
      %v79 = vld [vmem:[%s3] sm:$0xff]
      %v80 = vld [vmem:[%s3 + $0x8] sm:$0xff]
      %v81 = vld [vmem:[%s4] sm:$0xff]
      %v82 = vld [vmem:[%s4 + $0x8] sm:$0xff]
      %84 = vset.pattern.permute.xlu0 0
      %85 = vperm.xlu0 %84, %v77
      %v86 = vpop.permute.xlu0 %85
      %89 = vset.pattern.permute.xlu0 0
      %90 = vperm.xlu0 %89, %v78
      %v91 = vpop.permute.xlu0 %90
      %v93 = vsub.f32 %v73, %v86
      %v94 = vsub.f32 %v74, %v91
      %v95 = vadd.f32 %v79, 1e-06
      %v96 = vadd.f32 %v80, 1e-06
      %v97 = vrsqrt.pop %v95
      %v98 = vrsqrt.pop %v96
      %100 = vset.pattern.permute.xlu0 0
      %101 = vperm.xlu0 %100, %v97
      %v102 = vpop.permute.xlu0 %101
      %105 = vset.pattern.permute.xlu0 0
      %106 = vperm.xlu0 %105, %v98
      %v107 = vpop.permute.xlu0 %106
      %v109 = vmul.f32 %v93, %v102
      %v110 = vmul.f32 %v94, %v107
      %v111 = vmul.f32 %v109, -0.5
      %v112 = vmul.f32 %v110, -0.5
      %v113 = vmul.f32 %v111, %v109
      %v114 = vmul.f32 %v112, %v110
      %v115 = vmul.f32 %v113, 1.442695
      %v116 = vpow.pop %v115
      %v117 = vmul.f32 %v114, 1.442695
      %v118 = vpow.pop %v117
      %vm119 = vcmp.gt.f32.partialorder %v75, 0.0
      %vm120 = vcmp.gt.f32.partialorder %v76, 0.0
      %v121 = vsel %vm119, 0.0, %v116
      %v122 = vsel %vm120, 0.0, %v118
      %vm123 = vcmask 97280
      %v124 = vsel %vm123, %v121, 0.0
      %125 = vadd.xlane.f32.xlu0 %v124
      %v126 = vpop.xlane.xlu0 %125
      %v127 = vsel %vm123, %v122, 0.0
      %128 = vadd.xlane.f32.xlu0 %v127
      %v129 = vpop.xlane.xlu0 %128
      %v130 = vadd.f32 %v126, 1e-12
      %v131 = vadd.f32 %v129, 1e-12
      %v132 = vrcp.pop %v130
      %v133 = vmul.f32 %v121, %v132
      %v134 = vrcp.pop %v131
      %v135 = vmul.f32 %v122, %v134
      %137 = vset.pattern.permute.xlu0 0
      %138 = vperm.xlu0 %137, %v81
      %v139 = vpop.permute.xlu0 %138
      %142 = vset.pattern.permute.xlu0 0
      %143 = vperm.xlu0 %142, %v82
      %v144 = vpop.permute.xlu0 %143
      %v146 = vmul.f32 %v133, %v139
      %v147 = vmul.f32 %v135, %v144
      %v148 = vadd.f32 %v146, 0.0
      %v149 = vadd.f32 %v147, 0.0
      %150 = vset.pattern.permute.xlu0 1
      %151 = vperm.xlu0 %150, %v77
      %v152 = vpop.permute.xlu0 %151
      %154 = vset.pattern.permute.xlu0 1
      %155 = vperm.xlu0 %154, %v78
      %v156 = vpop.permute.xlu0 %155
      %v158 = vsub.f32 %v73, %v152
      %v159 = vsub.f32 %v74, %v156
      %160 = vset.pattern.permute.xlu0 1
      %161 = vperm.xlu0 %160, %v97
      %v162 = vpop.permute.xlu0 %161
      %164 = vset.pattern.permute.xlu0 1
      %165 = vperm.xlu0 %164, %v98
      %v166 = vpop.permute.xlu0 %165
      %v168 = vmul.f32 %v158, %v162
      %v169 = vmul.f32 %v159, %v166
      %v170 = vmul.f32 %v168, -0.5
      %v171 = vmul.f32 %v169, -0.5
      %v172 = vmul.f32 %v170, %v168
      %v173 = vmul.f32 %v171, %v169
      %v174 = vmul.f32 %v172, 1.442695
      %v175 = vpow.pop %v174
      %v176 = vmul.f32 %v173, 1.442695
      %v177 = vpow.pop %v176
      %v178 = vsel %vm119, 0.0, %v175
      %v179 = vsel %vm120, 0.0, %v177
      %v180 = vsel %vm123, %v178, 0.0
      %181 = vadd.xlane.f32.xlu0 %v180
      %v182 = vpop.xlane.xlu0 %181
      %v183 = vsel %vm123, %v179, 0.0
      %184 = vadd.xlane.f32.xlu0 %v183
      %v185 = vpop.xlane.xlu0 %184
      %v186 = vadd.f32 %v182, 1e-12
      %v187 = vadd.f32 %v185, 1e-12
      %v188 = vrcp.pop %v186
      %v189 = vmul.f32 %v178, %v188
      %v190 = vrcp.pop %v187
      %v191 = vmul.f32 %v179, %v190
      %192 = vset.pattern.permute.xlu0 1
      %193 = vperm.xlu0 %192, %v81
      %v194 = vpop.permute.xlu0 %193
      %196 = vset.pattern.permute.xlu0 1
      %197 = vperm.xlu0 %196, %v82
      %v198 = vpop.permute.xlu0 %197
      %v200 = vmul.f32 %v189, %v194
      %v201 = vmul.f32 %v191, %v198
      %v202 = vadd.f32 %v148, %v200
      %v203 = vadd.f32 %v149, %v201
      %v204 = vlaneseq
      %v205 = vshrl.u32 %v204, 7
      %v206 = vadd.s32 %v205, 8
      %s207 = smul.u32 0, 16
      %v208 = vstv %s207
      %v209 = vadd.s32 %v205, %v208
      %v210 = vadd.s32 %v206, %v208
      %v211 = vld [vmem:[#allocation8] sm:$0xff]
      %v212 = vld [vmem:[#allocation8 + $0x8] sm:$0xff]
      %vm213 = vcmp.eq.s32.totalorder %v211, %v209
      %vm214 = vcmp.eq.s32.totalorder %v212, %v210
      %v215 = vsel %vm213, 0.0, %v202
      %v216 = vsel %vm214, 0.0, %v203
      %217 = vst.msk [vmem:[#allocation2] sm:$0xff] %vm123, %v215
      %218 = vst.msk [vmem:[#allocation2 + $0x8] sm:$0xff] %vm123, %v216
      %219 = vst [vmem:[#allocation9] sm:$0xff] 0.0
      %220 = vst [vmem:[#allocation9 + $0x8] sm:$0xff] 0.0
    $region45: #{tpu_custom_call.1} parent=1 // pred_fallthru
      _
    %v221 = vld [vmem:[#allocation8] sm:$0xff]
    %v222 = vld [vmem:[#allocation8 + $0x8] sm:$0xff]
    %s223 = smul.u32 0, 128
    %v224 = vstv %s223
    %v225 = vsub.s32 %v221, %v224
    %v226 = vsub.s32 %v222, %v224
    %v227 = vld [vmem:[#allocation2] sm:$0xff]
    %v228 = vld [vmem:[#allocation2 + $0x8] sm:$0xff]
    %v229 = vlaneseq
    %v230 = vand.u32 %v229, 127
    %231 = vset.pattern.permute.xlu0 0
    %232 = vperm.xlu0 %231, %v225
    %v233 = vpop.permute.xlu0 %232
    %234 = vset.pattern.permute.xlu0 0
    %235 = vperm.xlu0 %234, %v226
    %v236 = vpop.permute.xlu0 %235
    %vm237 = vcmp.eq.s32.totalorder %v233, %v230
    %vm238 = vcmp.eq.s32.totalorder %v236, %v230
    %240 = vset.pattern.permute.xlu0 0
    %241 = vperm.xlu0 %240, %v227
    %v242 = vpop.permute.xlu0 %241
    %245 = vset.pattern.permute.xlu0 0
    %246 = vperm.xlu0 %245, %v228
    %v247 = vpop.permute.xlu0 %246
    %v249 = vsel %vm237, %v242, 0.0
    %v250 = vsel %vm238, %v247, 0.0
    %v251 = vadd.f32 %v249, 0.0
    %v252 = vadd.f32 %v250, 0.0
    %253 = vset.pattern.permute.xlu0 1
    %254 = vperm.xlu0 %253, %v225
    %v255 = vpop.permute.xlu0 %254
    %256 = vset.pattern.permute.xlu0 1
    %257 = vperm.xlu0 %256, %v226
    %v258 = vpop.permute.xlu0 %257
    %vm259 = vcmp.eq.s32.totalorder %v255, %v230
    %vm260 = vcmp.eq.s32.totalorder %v258, %v230
    %261 = vset.pattern.permute.xlu0 1
    %262 = vperm.xlu0 %261, %v227
    %v263 = vpop.permute.xlu0 %262
    %265 = vset.pattern.permute.xlu0 1
    %266 = vperm.xlu0 %265, %v228
    %v267 = vpop.permute.xlu0 %266
    %v269 = vsel %vm259, %v263, 0.0
    %v270 = vsel %vm260, %v267, 0.0
    %v271 = vadd.f32 %v251, %v269
    %v272 = vadd.f32 %v252, %v270
    %273 = vset.pattern.permute.xlu0 2
    %274 = vperm.xlu0 %273, %v225
    %v275 = vpop.permute.xlu0 %274
    %276 = vset.pattern.permute.xlu0 2
    %277 = vperm.xlu0 %276, %v226
    %v278 = vpop.permute.xlu0 %277
    %vm279 = vcmp.eq.s32.totalorder %v275, %v230
    %vm280 = vcmp.eq.s32.totalorder %v278, %v230
    %281 = vset.pattern.permute.xlu0 2
    %282 = vperm.xlu0 %281, %v227
    %v283 = vpop.permute.xlu0 %282
    %285 = vset.pattern.permute.xlu0 2
    %286 = vperm.xlu0 %285, %v228
    %v287 = vpop.permute.xlu0 %286
    %v289 = vsel %vm279, %v283, 0.0
    %v290 = vsel %vm280, %v287, 0.0
    %v291 = vadd.f32 %v271, %v289
    %v292 = vadd.f32 %v272, %v290
    %293 = vset.pattern.permute.xlu0 3
    %294 = vperm.xlu0 %293, %v225
    %v295 = vpop.permute.xlu0 %294
    %296 = vset.pattern.permute.xlu0 3
    %297 = vperm.xlu0 %296, %v226
    %v298 = vpop.permute.xlu0 %297
    %vm299 = vcmp.eq.s32.totalorder %v295, %v230
    %vm300 = vcmp.eq.s32.totalorder %v298, %v230
    %301 = vset.pattern.permute.xlu0 3
    %302 = vperm.xlu0 %301, %v227
    %v303 = vpop.permute.xlu0 %302
    %305 = vset.pattern.permute.xlu0 3
    %306 = vperm.xlu0 %305, %v228
    %v307 = vpop.permute.xlu0 %306
    %v309 = vsel %vm299, %v303, 0.0
    %v310 = vsel %vm300, %v307, 0.0
    %v311 = vadd.f32 %v291, %v309
    %v312 = vadd.f32 %v292, %v310
    %313 = vset.pattern.permute.xlu0 4
    %314 = vperm.xlu0 %313, %v225
    %v315 = vpop.permute.xlu0 %314
    %316 = vset.pattern.permute.xlu0 4
    %317 = vperm.xlu0 %316, %v226
    %v318 = vpop.permute.xlu0 %317
    %vm319 = vcmp.eq.s32.totalorder %v315, %v230
    %vm320 = vcmp.eq.s32.totalorder %v318, %v230
    %321 = vset.pattern.permute.xlu0 4
    %322 = vperm.xlu0 %321, %v227
    %v323 = vpop.permute.xlu0 %322
    %325 = vset.pattern.permute.xlu0 4
    %326 = vperm.xlu0 %325, %v228
    %v327 = vpop.permute.xlu0 %326
    %v329 = vsel %vm319, %v323, 0.0
    %v330 = vsel %vm320, %v327, 0.0
    %v331 = vadd.f32 %v311, %v329
    %v332 = vadd.f32 %v312, %v330
    %333 = vset.pattern.permute.xlu0 5
    %334 = vperm.xlu0 %333, %v225
    %v335 = vpop.permute.xlu0 %334
    %336 = vset.pattern.permute.xlu0 5
    %337 = vperm.xlu0 %336, %v226
    %v338 = vpop.permute.xlu0 %337
    %vm339 = vcmp.eq.s32.totalorder %v335, %v230
    %vm340 = vcmp.eq.s32.totalorder %v338, %v230
    %341 = vset.pattern.permute.xlu0 5
    %342 = vperm.xlu0 %341, %v227
    %v343 = vpop.permute.xlu0 %342
    %345 = vset.pattern.permute.xlu0 5
    %346 = vperm.xlu0 %345, %v228
    %v347 = vpop.permute.xlu0 %346
    %v349 = vsel %vm339, %v343, 0.0
    %v350 = vsel %vm340, %v347, 0.0
    %v351 = vadd.f32 %v331, %v349
    %v352 = vadd.f32 %v332, %v350
    %353 = vset.pattern.permute.xlu0 6
    %354 = vperm.xlu0 %353, %v225
    %v355 = vpop.permute.xlu0 %354
    %356 = vset.pattern.permute.xlu0 6
    %357 = vperm.xlu0 %356, %v226
    %v358 = vpop.permute.xlu0 %357
    %vm359 = vcmp.eq.s32.totalorder %v355, %v230
    %vm360 = vcmp.eq.s32.totalorder %v358, %v230
    %361 = vset.pattern.permute.xlu0 6
    %362 = vperm.xlu0 %361, %v227
    %v363 = vpop.permute.xlu0 %362
    %365 = vset.pattern.permute.xlu0 6
    %366 = vperm.xlu0 %365, %v228
    %v367 = vpop.permute.xlu0 %366
    %v369 = vsel %vm359, %v363, 0.0
    %v370 = vsel %vm360, %v367, 0.0
    %v371 = vadd.f32 %v351, %v369
    %v372 = vadd.f32 %v352, %v370
    %373 = vset.pattern.permute.xlu0 7
    %374 = vperm.xlu0 %373, %v225
    %v375 = vpop.permute.xlu0 %374
    %376 = vset.pattern.permute.xlu0 7
    %377 = vperm.xlu0 %376, %v226
    %v378 = vpop.permute.xlu0 %377
    %vm379 = vcmp.eq.s32.totalorder %v375, %v230
    %vm380 = vcmp.eq.s32.totalorder %v378, %v230
    %381 = vset.pattern.permute.xlu0 7
    %382 = vperm.xlu0 %381, %v227
    %v383 = vpop.permute.xlu0 %382
    %385 = vset.pattern.permute.xlu0 7
    %386 = vperm.xlu0 %385, %v228
    %v387 = vpop.permute.xlu0 %386
    %v389 = vsel %vm379, %v383, 0.0
    %v390 = vsel %vm380, %v387, 0.0
    %v391 = vadd.f32 %v371, %v389
    %v392 = vadd.f32 %v372, %v390
    %393 = vset.pattern.permute.xlu0 8
    %394 = vperm.xlu0 %393, %v225
    %v395 = vpop.permute.xlu0 %394
    %396 = vset.pattern.permute.xlu0 8
    %397 = vperm.xlu0 %396, %v226
    %v398 = vpop.permute.xlu0 %397
    %vm399 = vcmp.eq.s32.totalorder %v395, %v230
    %vm400 = vcmp.eq.s32.totalorder %v398, %v230
    %401 = vset.pattern.permute.xlu0 8
    %402 = vperm.xlu0 %401, %v227
    %v403 = vpop.permute.xlu0 %402
    %405 = vset.pattern.permute.xlu0 8
    %406 = vperm.xlu0 %405, %v228
    %v407 = vpop.permute.xlu0 %406
    %v409 = vsel %vm399, %v403, 0.0
    %v410 = vsel %vm400, %v407, 0.0
    %v411 = vadd.f32 %v391, %v409
    %v412 = vadd.f32 %v392, %v410
    %413 = vset.pattern.permute.xlu0 9
    %414 = vperm.xlu0 %413, %v225
    %v415 = vpop.permute.xlu0 %414
    %416 = vset.pattern.permute.xlu0 9
    %417 = vperm.xlu0 %416, %v226
    %v418 = vpop.permute.xlu0 %417
    %vm419 = vcmp.eq.s32.totalorder %v415, %v230
    %vm420 = vcmp.eq.s32.totalorder %v418, %v230
    %421 = vset.pattern.permute.xlu0 9
    %422 = vperm.xlu0 %421, %v227
    %v423 = vpop.permute.xlu0 %422
    %425 = vset.pattern.permute.xlu0 9
    %426 = vperm.xlu0 %425, %v228
    %v427 = vpop.permute.xlu0 %426
    %v429 = vsel %vm419, %v423, 0.0
    %v430 = vsel %vm420, %v427, 0.0
    %v431 = vadd.f32 %v411, %v429
    %v432 = vadd.f32 %v412, %v430
    %433 = vset.pattern.permute.xlu0 10
    %434 = vperm.xlu0 %433, %v225
    %v435 = vpop.permute.xlu0 %434
    %436 = vset.pattern.permute.xlu0 10
    %437 = vperm.xlu0 %436, %v226
    %v438 = vpop.permute.xlu0 %437
    %vm439 = vcmp.eq.s32.totalorder %v435, %v230
    %vm440 = vcmp.eq.s32.totalorder %v438, %v230
    %441 = vset.pattern.permute.xlu0 10
    %442 = vperm.xlu0 %441, %v227
    %v443 = vpop.permute.xlu0 %442
    %445 = vset.pattern.permute.xlu0 10
    %446 = vperm.xlu0 %445, %v228
    %v447 = vpop.permute.xlu0 %446
    %v449 = vsel %vm439, %v443, 0.0
    %v450 = vsel %vm440, %v447, 0.0
    %v451 = vadd.f32 %v431, %v449
    %v452 = vadd.f32 %v432, %v450
    %453 = vset.pattern.permute.xlu0 11
    %454 = vperm.xlu0 %453, %v225
    %v455 = vpop.permute.xlu0 %454
    %456 = vset.pattern.permute.xlu0 11
    %457 = vperm.xlu0 %456, %v226
    %v458 = vpop.permute.xlu0 %457
    %vm459 = vcmp.eq.s32.totalorder %v455, %v230
    %vm460 = vcmp.eq.s32.totalorder %v458, %v230
    %461 = vset.pattern.permute.xlu0 11
    %462 = vperm.xlu0 %461, %v227
    %v463 = vpop.permute.xlu0 %462
    %465 = vset.pattern.permute.xlu0 11
    %466 = vperm.xlu0 %465, %v228
    %v467 = vpop.permute.xlu0 %466
    %v469 = vsel %vm459, %v463, 0.0
    %v470 = vsel %vm460, %v467, 0.0
    %v471 = vadd.f32 %v451, %v469
    %v472 = vadd.f32 %v452, %v470
    %v473 = vld [vmem:[%s6] sm:$0xf]
    %v474 = vld [vmem:[%s6 + $0x4] sm:$0xf]
    %v475 = vld [vmem:[%s6 + $0x8] sm:$0xf]
    %v476 = vld [vmem:[%s6 + $0xc] sm:$0xf]
    %v477 = vld [vmem:[%s6 + $0x10] sm:$0xf]
    %v478 = vld [vmem:[%s6 + $0x14] sm:$0xf]
    %v479 = vld [vmem:[%s6 + $0x18] sm:$0xf]
    %v480 = vld [vmem:[%s6 + $0x1c] sm:$0xf]
    %v481 = vld [vmem:[%s6 + $0x20] sm:$0xf]
    %v482 = vld [vmem:[%s6 + $0x24] sm:$0xf]
    %v483 = vld [vmem:[%s6 + $0x28] sm:$0xf]
    %v484 = vld [vmem:[%s6 + $0x2c] sm:$0xf]
    %v485 = vld [vmem:[%s6 + $0x30] sm:$0xf]
    %v486 = vld [vmem:[%s6 + $0x34] sm:$0xf]
    %v487 = vld [vmem:[%s6 + $0x38] sm:$0xf]
    %v488 = vld [vmem:[%s6 + $0x3c] sm:$0xf]
    %v489 = vld [vmem:[#allocation9] sm:$0xff]
    %v490 = vld [vmem:[#allocation9 + $0x8] sm:$0xff]
    %v491 = vpack.c.bf16 %v472, %v471
    %v508 = vunpack.c.l.b16 %v473
    %v509 = vunpack.c.l.b16 %v474
    %v510 = vunpack.c.l.b16 %v475
    %v511 = vunpack.c.l.b16 %v476
    %v512 = vunpack.c.l.b16 %v477
    %v513 = vunpack.c.l.b16 %v478
    %v514 = vunpack.c.l.b16 %v479
    %v515 = vunpack.c.l.b16 %v480
    %v516 = vunpack.c.l.b16 %v481
    %v517 = vunpack.c.l.b16 %v482
    %v518 = vunpack.c.l.b16 %v483
    %v519 = vunpack.c.l.b16 %v484
    %v520 = vunpack.c.l.b16 %v485
    %v521 = vunpack.c.l.b16 %v486
    %v522 = vunpack.c.l.b16 %v487
    %v523 = vunpack.c.l.b16 %v488
    %v524 = vpack.c.b16 %v509, %v508
    %v525 = vpack.c.b16 %v511, %v510
    %v526 = vpack.c.b16 %v513, %v512
    %v527 = vpack.c.b16 %v515, %v514
    %v528 = vpack.c.b16 %v517, %v516
    %v529 = vpack.c.b16 %v519, %v518
    %v530 = vpack.c.b16 %v521, %v520
    %v531 = vpack.c.b16 %v523, %v522
    %540 = vmatprep.subr.bf16.mxu0 0
    %541 = vmatpush1.bf16.msra.mxu0 %v524
    %542 = vmatprep.subr.bf16.mxu0 0
    %543 = vmatpush1.bf16.msra.mxu0 %v525
    %544 = vmatprep.subr.bf16.mxu0 0
    %545 = vmatpush1.bf16.msra.mxu0 %v526
    %546 = vmatprep.subr.bf16.mxu0 0
    %547 = vmatpush1.bf16.msra.mxu0 %v527
    %548 = vmatprep.subr.bf16.mxu0 0
    %549 = vmatpush1.bf16.msra.mxu0 %v528
    %550 = vmatprep.subr.bf16.mxu0 0
    %551 = vmatpush1.bf16.msra.mxu0 %v529
    %552 = vmatprep.subr.bf16.mxu0 0
    %553 = vmatpush1.bf16.msra.mxu0 %v530
    %554 = vmatprep.subr.bf16.mxu0 0
    %555 = vmatpush1.bf16.msra.mxu0 %v531
    %556 = vmatprep.subr.bf16.mxu0 0
    %557 = vmatpush1.bf16.msra.mxu0 0
    %558 = vmatprep.subr.bf16.mxu0 0
    %559 = vmatpush1.bf16.msra.mxu0 0
    %560 = vmatprep.subr.bf16.mxu0 0
    %561 = vmatpush1.bf16.msra.mxu0 0
    %562 = vmatprep.subr.bf16.mxu0 0
    %563 = vmatpush1.bf16.msra.mxu0 0
    %564 = vmatprep.subr.bf16.mxu0 0
    %565 = vmatpush1.bf16.msra.mxu0 0
    %566 = vmatprep.subr.bf16.mxu0 0
    %567 = vmatpush1.bf16.msra.mxu0 0
    %568 = vmatprep.subr.bf16.mxu0 0
    %569 = vmatpush1.bf16.msra.mxu0 0
    %570 = vmatprep.subr.bf16.mxu0 0
    %571 = vmatpush1.bf16.msra.mxu0 0
    %572 = vmatprep.mubr.bf16.mxu0 0
    %573 = vmatmul.mubr.bf16.gmra.mrb[0].mxu0 %v491
    %v574 = vpop.f32.mrb[0].mxu0
    %v575 = vadd.f32 0.0, %v574
    %v576 = vpop.f32.mrb[0].mxu0
    %v577 = vpop.f32.mrb[0].mxu0
    %v578 = vadd.f32 0.0, %v577
    %v579 = vpop.f32.mrb[0].mxu0
    %580 = vdwg.mxu0
    %v581 = vadd.f32 %v489, %v575
    %v582 = vadd.f32 %v490, %v578
    %583 = vst [vmem:[#allocation9] sm:$0xff] %v581
    %584 = vst [vmem:[#allocation9 + $0x8] sm:$0xff] %v582
    // Predicated region
    $region46: #{tpu_custom_call.1} parent=1 // pred_check
      _
    $region47: #{tpu_custom_call.1} parent=1 // pred_check_branch
      %586 = sbr.rel (0) target = $region49
    $region48: #{tpu_custom_call.1} parent=1 // pred_region
      %s588 = ssub.s32 256, 256
      %589 = vsyncadd [#allocation5], %s588
      %s590 = sshll.u32 [#allocation9], 4
      %s591 = int_to_ptr.vmem [resolvable:$true] %s590
      %596 = dma.vmem_to_hbm [thread:$0]  %s591, 256, %s7, [#allocation5], 128, 128, 8
    $region49: #{tpu_custom_call.1} parent=1 // pred_fallthru
      _
    // Predicated region
    $region50: #{tpu_custom_call.1} parent=1 // pred_check
      _
    $region51: #{tpu_custom_call.1} parent=1 // pred_check_branch
      %598 = sbr.rel (0) target = $region53
    $region52: #{tpu_custom_call.1} parent=1 // pred_region
      %599 = dma.done [#allocation5], 256
    $region53: #{tpu_custom_call.1} parent=1 // pred_fallthru
      _
    %600 = vsyncpa [#allocation4], 1
    %601 = vsyncpa [#allocation7], 1
    %602 = vsyncpa [#allocation5], 1

</llo_original>
